<compile_context>
chip_gen: v6e
topology: v6e:2x2x1
jax: 0.10.0
libtpu: 0.0.40
codegen_flags: <defaults>
</compile_context>

<pallas_src>
import functools

import jax
import jax.numpy as jnp
from jax.experimental import pallas as pl
from jax.experimental.pallas import tpu as pltpu

HIDDEN = 128  # self.n_layers in the PyTorch module


def agent_kernel(x_ref, w1_ref, w2_ref, wh_ref, b_ref, out_ref, *, act_dim, bt, hw):
    """One batch tile of the full CombinedAgent forward.

    x_ref   : (2*bt, obs)       stacked [real rows ; imag rows] for this batch tile
    w1_ref  : (obs, 2H)         [W1_r | W1_i]
    w2_ref  : (H,   2H)         [W2_r | W2_i]
    wh_ref  : (H, 2*hw)         fused heads [Wm_r|Ws_r|Wv_r|pad -> hw || Wm_i|Ws_i|Wv_i|pad -> hw]
    b_ref   : (8, max(H, 2hw))  rows 0/1: layer1 (br-bi)/(br+bi); rows 2/3: layer2;
                                row 4: head bias, lanes [0:hw)=(br-bi), [hw:2hw)=(br+bi)
    out_ref : (bt, 2*hw)        lane-dense slab: real heads in [:, :hw], imag heads in [:, hw:]
    """
    H = HIDDEN

    # Stacked-plane helpers (straight-line code, defined once).
    row = jax.lax.broadcasted_iota(jnp.int32, (2 * bt, 1), 0)
    is_real = row < bt                                   # True on the real-plane rows
    sign = jnp.where(is_real, -1.0, 1.0).astype(jnp.float32)

    def complex_layer(s, w_ref, row_r, row_i):
        # s = [hr ; hi] (2bt, K),  w_ref = [Wr | Wi] (K, 2H)
        #   real = hr@Wr - hi@Wi + (br - bi)
        #   imag = hi@Wr + hr@Wi + (br + bi)
        # The half-swap is an XLU sublane rotation (no VMEM copy), the +/-1 is one VPU op,
        # and the MXU output is already in stacked [real; imag] layout for the next layer.
        swapped = pltpu.roll(s, shift=bt, axis=0) * sign                       # [-hi ; hr]
        p = jnp.dot(s, w_ref[:, :H], preferred_element_type=jnp.float32)
        q = jnp.dot(swapped, w_ref[:, H:], preferred_element_type=jnp.float32)
        b = jnp.where(is_real, b_ref[row_r:row_r + 1, :H], b_ref[row_i:row_i + 1, :H])
        return p + q + b

    s = x_ref[...]                                                             # (2bt, obs)

    s = jnp.maximum(complex_layer(s, w1_ref, 0, 1), 0.0)                       # complex_relu
    s = jnp.maximum(complex_layer(s, w2_ref, 2, 3), 0.0)                       # complex_relu

    # Fused heads: one packed MXU matmul, then recombine the plane blocks lane-dense.
    p = jnp.dot(s, wh_ref[...], preferred_element_type=jnp.float32)            # (2bt, 2hw)
    yr = p[:bt, :hw] - p[bt:, hw:]                                             # real heads
    yi = p[bt:, :hw] + p[:bt, hw:]                                             # imag heads
    y = jnp.concatenate([yr, yi], axis=1) + b_ref[4:5, :2 * hw]                # (bt, 2hw)

    # complex_sigmoid only on the sigma lanes of both planes (EUP + one VPU select).
    lane = jax.lax.broadcasted_iota(jnp.int32, y.shape, 1) & (hw - 1)
    sig_mask = (lane >= act_dim) & (lane < 2 * act_dim)
    out_ref[...] = jnp.where(sig_mask, jax.nn.sigmoid(y), y)


def init_complex_linear(key, in_f, out_f):
    """Deterministic params mimicking nn.Linear default init (uniform +/- 1/sqrt(fan_in)),
    one real Linear and one imaginary Linear per ComplexLinear."""
    bound = 1.0 / jnp.sqrt(float(in_f))
    k = jax.random.split(key, 4)
    wr = jax.random.uniform(k[0], (in_f, out_f), jnp.float32, -bound, bound)
    wi = jax.random.uniform(k[1], (in_f, out_f), jnp.float32, -bound, bound)
    br = jax.random.uniform(k[2], (1, out_f), jnp.float32, -bound, bound)
    bi = jax.random.uniform(k[3], (1, out_f), jnp.float32, -bound, bound)
    return wr, wi, br, bi


def init_params(key, obs_dim, act_dim):
    keys = jax.random.split(key, 5)
    p = {}
    p["w1_r"], p["w1_i"], p["b1_r"], p["b1_i"] = init_complex_linear(keys[0], obs_dim, HIDDEN)
    p["w2_r"], p["w2_i"], p["b2_r"], p["b2_i"] = init_complex_linear(keys[1], HIDDEN, HIDDEN)
    p["wm_r"], p["wm_i"], p["bm_r"], p["bm_i"] = init_complex_linear(keys[2], HIDDEN, act_dim)
    p["ws_r"], p["ws_i"], p["bs_r"], p["bs_i"] = init_complex_linear(keys[3], HIDDEN, act_dim)
    p["wv_r"], p["wv_i"], p["bv_r"], p["bv_i"] = init_complex_linear(keys[4], HIDDEN, 1)
    return p


def pack_params(p, hw):
    """Pack the 20 weight/bias planes into 4 kernel inputs (4 DMAs instead of 24)."""
    H = HIDDEN
    act_dim = p["wm_r"].shape[1]
    nh = 2 * act_dim + 1
    assert nh <= hw

    w1 = jnp.concatenate([p["w1_r"], p["w1_i"]], axis=1)                 # (obs, 2H)
    w2 = jnp.concatenate([p["w2_r"], p["w2_i"]], axis=1)                 # (H, 2H)

    whr = jnp.concatenate([p["wm_r"], p["ws_r"], p["wv_r"]], axis=1)     # (H, nh)
    whi = jnp.concatenate([p["wm_i"], p["ws_i"], p["wv_i"]], axis=1)     # (H, nh)
    whr = jnp.pad(whr, ((0, 0), (0, hw - nh)))
    whi = jnp.pad(whi, ((0, 0), (0, hw - nh)))
    wh = jnp.concatenate([whr, whi], axis=1)                             # (H, 2*hw)

    bhr = jnp.concatenate([p["bm_r"], p["bs_r"], p["bv_r"]], axis=1)[0]  # (nh,)
    bhi = jnp.concatenate([p["bm_i"], p["bs_i"], p["bv_i"]], axis=1)[0]  # (nh,)

    width = max(H, 2 * hw)
    bias = jnp.zeros((8, width), jnp.float32)
    bias = bias.at[0, :H].set((p["b1_r"] - p["b1_i"])[0])
    bias = bias.at[1, :H].set((p["b1_r"] + p["b1_i"])[0])
    bias = bias.at[2, :H].set((p["b2_r"] - p["b2_i"])[0])
    bias = bias.at[3, :H].set((p["b2_r"] + p["b2_i"])[0])
    bias = bias.at[4, :nh].set(bhr - bhi)
    bias = bias.at[4, hw:hw + nh].set(bhr + bhi)
    return w1, w2, wh, bias


def _round_up(x, m):
    return ((x + m - 1) // m) * m


def _pick_batch_tile(batch):
    """Batch-tile policy (perf review):
       * small batch  -> one tile, rounded up to a sublane multiple of 8
       * large batch  -> tiles capped at 512 rows and sized so the 1-D "parallel" grid has
         ~4+ steps: keeps both v7x TensorCores busy and gives the pipeline something to
         double-buffer, while the <0.5 MiB weight slabs stay VMEM-resident on every gen."""
    if batch <= 256:
        return _round_up(max(batch, 1), 8)
    return min(512, max(128, _round_up(batch // 4, 128)))


def combined_agent_forward(x, params):
    """x: complex64 (B, obs_dim). Returns (mean_action, sigma_action, value), all complex64."""
    B, obs_dim = x.shape
    act_dim = params["wm_r"].shape[1]
    H = HIDDEN
    nh = 2 * act_dim + 1
    hw = 64 if nh <= 64 else 128          # per-plane head lane width (shrunk output slab)
    assert nh <= hw, "fused head width must fit a single 128-lane block"

    bt = _pick_batch_tile(B)
    Bp = _round_up(B, bt)                 # pad batch so every tile is full (no giant fallback)
    n_tiles = Bp // bt

    xr = jnp.real(x).astype(jnp.float32)
    xi = jnp.imag(x).astype(jnp.float32)
    x3 = jnp.stack([xr, xi], axis=0)                                     # (2, B, obs)
    if Bp != B:
        x3 = jnp.pad(x3, ((0, 0), (0, Bp - B), (0, 0)))
    # Per-tile interleaved stacked layout [tile0_real; tile0_imag; tile1_real; ...]:
    # the kernel never has to concat/relayout the activation planes.
    xs = (x3.reshape(2, n_tiles, bt, obs_dim)
             .transpose(1, 0, 2, 3)
             .reshape(n_tiles * 2 * bt, obs_dim))

    w1, w2, wh, bias = pack_params(params, hw)

    out = pl.pallas_call(
        functools.partial(agent_kernel, act_dim=act_dim, bt=bt, hw=hw),
        out_shape=jax.ShapeDtypeStruct((Bp, 2 * hw), jnp.float32),
        grid=(n_tiles,),
        in_specs=[
            pl.BlockSpec((2 * bt, obs_dim), lambda i: (i, 0)),           # batch-tiled input
            pl.BlockSpec((obs_dim, 2 * H), lambda i: (0, 0)),            # resident weight slabs
            pl.BlockSpec((H, 2 * H), lambda i: (0, 0)),
            pl.BlockSpec((H, 2 * hw), lambda i: (0, 0)),
            pl.BlockSpec(bias.shape, lambda i: (0, 0)),
        ],
        out_specs=pl.BlockSpec((bt, 2 * hw), lambda i: (i, 0)),
        compiler_params=pltpu.CompilerParams(
            dimension_semantics=("parallel",)),                          # both TCs on v7x
    )(xs, w1, w2, wh, bias)

    out = out[:B]
    yr = out[:, :hw]
    yi = out[:, hw:2 * hw]
    mean = (yr[:, :act_dim] + 1j * yi[:, :act_dim]).astype(jnp.complex64)
    sigma = (yr[:, act_dim:2 * act_dim] + 1j * yi[:, act_dim:2 * act_dim]).astype(jnp.complex64)
    value = (yr[:, 2 * act_dim:nh] + 1j * yi[:, 2 * act_dim:nh]).astype(jnp.complex64)
    return mean, sigma, value


def reference_forward(x, p):
    """Pure-JAX reference with the same complex-plane math, for a sanity check."""
    def clin(hr, hi, wr, wi, br, bi):
        return (hr @ wr + br) - (hi @ wi + bi), (hi @ wr + br) + (hr @ wi + bi)

    xr, xi = jnp.real(x), jnp.imag(x)
    hr, hi = clin(xr, xi, p["w1_r"], p["w1_i"], p["b1_r"], p["b1_i"])
    hr, hi = jnp.maximum(hr, 0.0), jnp.maximum(hi, 0.0)
    hr, hi = clin(hr, hi, p["w2_r"], p["w2_i"], p["b2_r"], p["b2_i"])
    hr, hi = jnp.maximum(hr, 0.0), jnp.maximum(hi, 0.0)
    mr, mi = clin(hr, hi, p["wm_r"], p["wm_i"], p["bm_r"], p["bm_i"])
    sr, si = clin(hr, hi, p["ws_r"], p["ws_i"], p["bs_r"], p["bs_i"])
    vr, vi = clin(hr, hi, p["wv_r"], p["wv_i"], p["bv_r"], p["bv_i"])
    return (mr + 1j * mi, jax.nn.sigmoid(sr) + 1j * jax.nn.sigmoid(si), vr + 1j * vi)


if __name__ == "__main__":
    key = jax.random.PRNGKey(0)
    k_x, k_p = jax.random.split(key)

    B, OBS_DIM, ACT_DIM = 8, 16, 4
    params = init_params(k_p, OBS_DIM, ACT_DIM)

    kx_r, kx_i = jax.random.split(k_x)
    x = (jax.random.normal(kx_r, (B, OBS_DIM), jnp.float32)
         + 1j * jax.random.normal(kx_i, (B, OBS_DIM), jnp.float32)).astype(jnp.complex64)

    mean_action, sigma_action, value = combined_agent_forward(x, params)
    jax.block_until_ready((mean_action, sigma_action, value))

    # Sanity check against a plain-JAX reference.
    ref_mean, ref_sigma, ref_value = reference_forward(x, params)
    assert jnp.allclose(mean_action, ref_mean, atol=1e-4, rtol=1e-3)
    assert jnp.allclose(sigma_action, ref_sigma, atol=1e-4, rtol=1e-3)
    assert jnp.allclose(value, ref_value, atol=1e-4, rtol=1e-3)
    assert mean_action.shape == (B, ACT_DIM)
    assert sigma_action.shape == (B, ACT_DIM)
    assert value.shape == (B, 1)

    print("KERNEL_OK")
</pallas_src>

<mosaic_0001>
module attributes {stable_mosaic.version = 11 : i64} {
  func.func @agent_kernel(%arg0: i32, %arg1: memref<16x16xf32, #tpu.memory_space<vmem>>, %arg2: memref<16x256xf32, #tpu.memory_space<vmem>>, %arg3: memref<128x256xf32, #tpu.memory_space<vmem>>, %arg4: memref<128x128xf32, #tpu.memory_space<vmem>>, %arg5: memref<8x128xf32, #tpu.memory_space<vmem>>, %arg6: memref<8x128xf32, #tpu.memory_space<vmem>>) attributes {dimension_semantics = [#tpu.dimension_semantics<parallel>], iteration_bounds = array<i64: 1>, scalar_prefetch = 0 : i64, scratch_operands = 0 : i64, tpu.core_type = #tpu.core_type<tc>, window_params = [{transform_indices = @transform_0, window_bounds = array<i64: 16, 16>}, {pipeline_mode = #tpu.pipeline_mode<synchronous>, transform_indices = @transform_1, window_bounds = array<i64: 16, 256>}, {pipeline_mode = #tpu.pipeline_mode<synchronous>, transform_indices = @transform_2, window_bounds = array<i64: 128, 256>}, {pipeline_mode = #tpu.pipeline_mode<synchronous>, transform_indices = @transform_3, window_bounds = array<i64: 128, 128>}, {pipeline_mode = #tpu.pipeline_mode<synchronous>, transform_indices = @transform_4, window_bounds = array<i64: 8, 128>}, {transform_indices = @transform_5, window_bounds = array<i64: 8, 128>}]} {
    %0 = tpu.iota {dimensions = array<i32: 0>} : vector<16x1xi32>
    %c8_i32 = arith.constant 8 : i32
    %1 = vector.broadcast %c8_i32 : i32 to vector<16x1xi32>
    %2 = arith.cmpi slt, %0, %1 : vector<16x1xi32>
    %cst = arith.constant -1.000000e+00 : f32
    %cst_0 = arith.constant 1.000000e+00 : f32
    %3 = vector.broadcast %cst : f32 to vector<16x1xf32>
    %4 = vector.broadcast %cst_0 : f32 to vector<16x1xf32>
    %5 = arith.select %2, %3, %4 : vector<16x1xi1>, vector<16x1xf32>
    %c0 = arith.constant 0 : index
    %c0_1 = arith.constant 0 : index
    %6 = vector.load %arg1[%c0, %c0_1] : memref<16x16xf32, #tpu.memory_space<vmem>>, vector<16x16xf32>
    %c8_i32_2 = arith.constant 8 : i32
    %7 = tpu.dynamic_rotate %6 by %c8_i32_2 dim 0 : vector<16x16xf32>, i32 -> vector<16x16xf32>
    %8 = vector.broadcast %5 : vector<16x1xf32> to vector<16x16xf32>
    %9 = arith.mulf %7, %8 : vector<16x16xf32>
    %c0_3 = arith.constant 0 : index
    %c0_4 = arith.constant 0 : index
    %10 = vector.load %arg2[%c0_3, %c0_4] : memref<16x256xf32, #tpu.memory_space<vmem>>, vector<16x128xf32>
    %cst_5 = arith.constant dense<0.000000e+00> : vector<16x128xf32>
    %11 = tpu.matmul %6, %10, %cst_5 {dimension_numbers = #tpu.dot_dimension_numbers<[1], [0], [0], [1], [0, 0, 1, 1], [], []>} : vector<16x16xf32>, vector<16x128xf32>, vector<16x128xf32> -> vector<16x128xf32>
    %c0_6 = arith.constant 0 : index
    %c128 = arith.constant 128 : index
    %12 = vector.load %arg2[%c0_6, %c128] : memref<16x256xf32, #tpu.memory_space<vmem>>, vector<16x128xf32>
    %cst_7 = arith.constant dense<0.000000e+00> : vector<16x128xf32>
    %13 = tpu.matmul %9, %12, %cst_7 {dimension_numbers = #tpu.dot_dimension_numbers<[1], [0], [0], [1], [0, 0, 1, 1], [], []>} : vector<16x16xf32>, vector<16x128xf32>, vector<16x128xf32> -> vector<16x128xf32>
    %c0_8 = arith.constant 0 : index
    %c0_9 = arith.constant 0 : index
    %14 = vector.load %arg5[%c0_8, %c0_9] : memref<8x128xf32, #tpu.memory_space<vmem>>, vector<1x128xf32>
    %c1 = arith.constant 1 : index
    %c0_10 = arith.constant 0 : index
    %15 = vector.load %arg5[%c1, %c0_10] : memref<8x128xf32, #tpu.memory_space<vmem>>, vector<1x128xf32>
    %16 = vector.shape_cast %2 : vector<16x1xi1> to vector<16x1xi1>
    %17 = vector.broadcast %16 : vector<16x1xi1> to vector<16x128xi1>
    %18 = vector.shape_cast %14 : vector<1x128xf32> to vector<1x128xf32>
    %19 = vector.broadcast %18 : vector<1x128xf32> to vector<16x128xf32>
    %20 = vector.shape_cast %15 : vector<1x128xf32> to vector<1x128xf32>
    %21 = vector.broadcast %20 : vector<1x128xf32> to vector<16x128xf32>
    %22 = arith.select %17, %19, %21 : vector<16x128xi1>, vector<16x128xf32>
    %23 = arith.addf %11, %13 : vector<16x128xf32>
    %24 = arith.addf %23, %22 : vector<16x128xf32>
    %cst_11 = arith.constant 0.000000e+00 : f32
    %25 = vector.broadcast %cst_11 : f32 to vector<16x128xf32>
    %26 = arith.maximumf %24, %25 : vector<16x128xf32>
    %c8_i32_12 = arith.constant 8 : i32
    %27 = tpu.dynamic_rotate %26 by %c8_i32_12 dim 0 : vector<16x128xf32>, i32 -> vector<16x128xf32>
    %28 = vector.broadcast %5 : vector<16x1xf32> to vector<16x128xf32>
    %29 = arith.mulf %27, %28 : vector<16x128xf32>
    %c0_13 = arith.constant 0 : index
    %c0_14 = arith.constant 0 : index
    %30 = vector.load %arg3[%c0_13, %c0_14] : memref<128x256xf32, #tpu.memory_space<vmem>>, vector<128x128xf32>
    %cst_15 = arith.constant dense<0.000000e+00> : vector<16x128xf32>
    %31 = tpu.matmul %26, %30, %cst_15 {dimension_numbers = #tpu.dot_dimension_numbers<[1], [0], [0], [1], [0, 0, 1, 1], [], []>} : vector<16x128xf32>, vector<128x128xf32>, vector<16x128xf32> -> vector<16x128xf32>
    %c0_16 = arith.constant 0 : index
    %c128_17 = arith.constant 128 : index
    %32 = vector.load %arg3[%c0_16, %c128_17] : memref<128x256xf32, #tpu.memory_space<vmem>>, vector<128x128xf32>
    %cst_18 = arith.constant dense<0.000000e+00> : vector<16x128xf32>
    %33 = tpu.matmul %29, %32, %cst_18 {dimension_numbers = #tpu.dot_dimension_numbers<[1], [0], [0], [1], [0, 0, 1, 1], [], []>} : vector<16x128xf32>, vector<128x128xf32>, vector<16x128xf32> -> vector<16x128xf32>
    %c2 = arith.constant 2 : index
    %c0_19 = arith.constant 0 : index
    %34 = vector.load %arg5[%c2, %c0_19] : memref<8x128xf32, #tpu.memory_space<vmem>>, vector<1x128xf32>
    %c3 = arith.constant 3 : index
    %c0_20 = arith.constant 0 : index
    %35 = vector.load %arg5[%c3, %c0_20] : memref<8x128xf32, #tpu.memory_space<vmem>>, vector<1x128xf32>
    %36 = vector.shape_cast %2 : vector<16x1xi1> to vector<16x1xi1>
    %37 = vector.broadcast %36 : vector<16x1xi1> to vector<16x128xi1>
    %38 = vector.shape_cast %34 : vector<1x128xf32> to vector<1x128xf32>
    %39 = vector.broadcast %38 : vector<1x128xf32> to vector<16x128xf32>
    %40 = vector.shape_cast %35 : vector<1x128xf32> to vector<1x128xf32>
    %41 = vector.broadcast %40 : vector<1x128xf32> to vector<16x128xf32>
    %42 = arith.select %37, %39, %41 : vector<16x128xi1>, vector<16x128xf32>
    %43 = arith.addf %31, %33 : vector<16x128xf32>
    %44 = arith.addf %43, %42 : vector<16x128xf32>
    %cst_21 = arith.constant 0.000000e+00 : f32
    %45 = vector.broadcast %cst_21 : f32 to vector<16x128xf32>
    %46 = arith.maximumf %44, %45 : vector<16x128xf32>
    %c0_22 = arith.constant 0 : index
    %c0_23 = arith.constant 0 : index
    %47 = vector.load %arg4[%c0_22, %c0_23] : memref<128x128xf32, #tpu.memory_space<vmem>>, vector<128x128xf32>
    %cst_24 = arith.constant dense<0.000000e+00> : vector<16x128xf32>
    %48 = tpu.matmul %46, %47, %cst_24 {dimension_numbers = #tpu.dot_dimension_numbers<[1], [0], [0], [1], [0, 0, 1, 1], [], []>} : vector<16x128xf32>, vector<128x128xf32>, vector<16x128xf32> -> vector<16x128xf32>
    %49 = vector.extract_strided_slice %48 {offsets = [0, 0], sizes = [8, 64], strides = [1, 1]} : vector<16x128xf32> to vector<8x64xf32>
    %50 = vector.extract_strided_slice %48 {offsets = [8, 64], sizes = [8, 64], strides = [1, 1]} : vector<16x128xf32> to vector<8x64xf32>
    %51 = arith.subf %49, %50 : vector<8x64xf32>
    %52 = vector.extract_strided_slice %48 {offsets = [8, 0], sizes = [8, 64], strides = [1, 1]} : vector<16x128xf32> to vector<8x64xf32>
    %53 = vector.extract_strided_slice %48 {offsets = [0, 64], sizes = [8, 64], strides = [1, 1]} : vector<16x128xf32> to vector<8x64xf32>
    %54 = arith.addf %52, %53 : vector<8x64xf32>
    %55 = tpu.concatenate %51, %54 in 1 : vector<8x64xf32>, vector<8x64xf32> -> vector<8x128xf32>
    %c4 = arith.constant 4 : index
    %c0_25 = arith.constant 0 : index
    %56 = vector.load %arg5[%c4, %c0_25] : memref<8x128xf32, #tpu.memory_space<vmem>>, vector<1x128xf32>
    %57 = vector.broadcast %56 : vector<1x128xf32> to vector<8x128xf32>
    %58 = arith.addf %55, %57 : vector<8x128xf32>
    %59 = tpu.iota {dimensions = array<i32: 1>} : vector<8x128xi32>
    %c63_i32 = arith.constant 63 : i32
    %60 = vector.broadcast %c63_i32 : i32 to vector<8x128xi32>
    %61 = arith.andi %59, %60 : vector<8x128xi32>
    %c4_i32 = arith.constant 4 : i32
    %62 = vector.broadcast %c4_i32 : i32 to vector<8x128xi32>
    %63 = arith.cmpi sge, %61, %62 : vector<8x128xi32>
    %c8_i32_26 = arith.constant 8 : i32
    %64 = vector.broadcast %c8_i32_26 : i32 to vector<8x128xi32>
    %65 = arith.cmpi slt, %61, %64 : vector<8x128xi32>
    %66 = arith.andi %63, %65 : vector<8x128xi1>
    %67 = arith.negf %58 : vector<8x128xf32>
    %68 = math.exp %67 : vector<8x128xf32>
    %cst_27 = arith.constant 1.000000e+00 : f32
    %69 = vector.broadcast %cst_27 : f32 to vector<8x128xf32>
    %70 = arith.addf %69, %68 : vector<8x128xf32>
    %71 = arith.divf %69, %70 : vector<8x128xf32>
    %72 = arith.select %66, %71, %58 : vector<8x128xi1>, vector<8x128xf32>
    %c0_28 = arith.constant 0 : index
    %c0_29 = arith.constant 0 : index
    %73 = vector.load %arg6[%c0_28, %c0_29] : memref<8x128xf32, #tpu.memory_space<vmem>>, vector<8x128xf32>
    tpu.vector_store %arg6[%c0_28, %c0_29], %72 {strides = array<i32>} : memref<8x128xf32, #tpu.memory_space<vmem>>, vector<8x128xf32>,
    return
  }
  func.func @transform_0(%arg0: i32) -> (i32, i32) {
    %c0_i32 = arith.constant 0 : i32
    %c0_i32_0 = arith.constant 0 : i32
    return %arg0, %c0_i32 : i32, i32
  }
  func.func @transform_1(%arg0: i32) -> (i32, i32) {
    %c0_i32 = arith.constant 0 : i32
    %c0_i32_0 = arith.constant 0 : i32
    %c0_i32_1 = arith.constant 0 : i32
    return %c0_i32, %c0_i32_0 : i32, i32
  }
  func.func @transform_2(%arg0: i32) -> (i32, i32) {
    %c0_i32 = arith.constant 0 : i32
    %c0_i32_0 = arith.constant 0 : i32
    %c0_i32_1 = arith.constant 0 : i32
    return %c0_i32, %c0_i32_0 : i32, i32
  }
  func.func @transform_3(%arg0: i32) -> (i32, i32) {
    %c0_i32 = arith.constant 0 : i32
    %c0_i32_0 = arith.constant 0 : i32
    %c0_i32_1 = arith.constant 0 : i32
    return %c0_i32, %c0_i32_0 : i32, i32
  }
  func.func @transform_4(%arg0: i32) -> (i32, i32) {
    %c0_i32 = arith.constant 0 : i32
    %c0_i32_0 = arith.constant 0 : i32
    %c0_i32_1 = arith.constant 0 : i32
    return %c0_i32, %c0_i32_0 : i32, i32
  }
  func.func @transform_5(%arg0: i32) -> (i32, i32) {
    %c0_i32 = arith.constant 0 : i32
    %c0_i32_0 = arith.constant 0 : i32
    return %arg0, %c0_i32 : i32, i32
  }
}

</mosaic_0001>

<llo_original>
// kernel: tpu_custom_call.1
$region0: #{tpu_custom_call.1}
  #allocation0 [shape = 'u32[]', space=smem, size = 0x4, offset = 0x4, fixed_abs, tag = 'smem constant byte address 0x4 - core index']
  #allocation1 [shape = 'u32[144,128]{1,0:T(1,128)}', space=vmem, size = 0x12000, scoped, tag = 'internal scratch']
  %s0 = inlined_call_operand.hbm [shape: f32[16,16], index: 0, kind: input, shape index: {}]
  %s1 = inlined_call_operand.hbm [shape: f32[16,256], index: 1, kind: input, shape index: {}]
  %s2 = inlined_call_operand.hbm [shape: f32[128,256], index: 2, kind: input, shape index: {}]
  %s3 = inlined_call_operand.hbm [shape: f32[128,128], index: 3, kind: input, shape index: {}]
  %s4 = inlined_call_operand.hbm [shape: f32[8,128], index: 4, kind: input, shape index: {}]
  %s5 = inlined_call_operand.hbm [shape: f32[8,128], index: 5, kind: output, shape index: {}]
  %s6 = sld [smem:[#allocation0]]
  $region50: #{tpu_custom_call.1} parent=0
    _
  %s8 = ssub.s32 1, %s6
  %s9 = scalar_select 0, %s8, %s6
  $region1: #{tpu_custom_call.1} parent=0
    #allocation2 [shape = 'u8[8192]{0}', space=vmem, size = 0x2000, scoped, tag = 'input window, operand 0, single buffered']
    #allocation3 [shape = 's32[1]{0}', space=sflag, size = 0x4, scoped, tag = 'scoped memory for tpu_custom_call.1']
    #allocation4 [shape = 's32[1]{0}', space=sflag, size = 0x4, scoped, tag = 'scoped memory for tpu_custom_call.1']
    #allocation5 [shape = 'u8[16384]{0}', space=vmem, size = 0x4000, scoped, tag = 'input window, operand 1, single buffered']
    #allocation6 [shape = 's32[1]{0}', space=sflag, size = 0x4, scoped, tag = 'scoped memory for tpu_custom_call.1']
    #allocation7 [shape = 'u8[131072]{0}', space=vmem, size = 0x20000, scoped, tag = 'input window, operand 2, single buffered']
    #allocation8 [shape = 'u8[65536]{0}', space=vmem, size = 0x10000, scoped, tag = 'input window, operand 3, single buffered']
    #allocation9 [shape = 's32[1]{0}', space=sflag, size = 0x4, scoped, tag = 'scoped memory for tpu_custom_call.1']
    #allocation10 [shape = 'u8[4096]{0}', space=vmem, size = 0x1000, scoped, tag = 'input window, operand 4, single buffered']
    #allocation11 [shape = 'u8[4096]{0}', space=vmem, size = 0x1000, scoped, tag = 'output window, operand 0, single buffered']
    %10 = vsyncpa [#allocation3], 0
    %11 = vsyncpa [#allocation6], 0
    %12 = vsyncpa [#allocation9], 0
    %13 = vsyncpa [#allocation4], 0
    // Predicated region
    $region2: #{tpu_custom_call.1} parent=1 // pred_check
      _
    $region3: #{tpu_custom_call.1} parent=1 // pred_check_branch
      %15 = sbr.rel (0) target = $region5
    $region4: #{tpu_custom_call.1} parent=1 // pred_region
      %s17 = ssub.s32 256, 256
      %18 = vsyncadd [#allocation3], %s17
      %s19 = sshll.u32 [#allocation2], 4
      %s20 = int_to_ptr.vmem [resolvable:$true] %s19
      %25 = dma.hbm_to_vmem [thread:$0]  %s0, 256, %s20, [#allocation3], 128, 128, 8
    $region5: #{tpu_custom_call.1} parent=1 // pred_fallthru
      _
    // Predicated region
    $region6: #{tpu_custom_call.1} parent=1 // pred_check
      _
    $region7: #{tpu_custom_call.1} parent=1 // pred_check_branch
      %27 = sbr.rel (0) target = $region9
    $region8: #{tpu_custom_call.1} parent=1 // pred_region
      %s29 = ssub.s32 512, 512
      %30 = vsyncadd [#allocation6], %s29
      %s31 = sshll.u32 [#allocation5], 4
      %s32 = int_to_ptr.vmem [resolvable:$true] %s31
      %37 = dma.hbm_to_vmem [thread:$0]  %s1, 512, %s32, [#allocation6], 256, 256, 16
    $region9: #{tpu_custom_call.1} parent=1 // pred_fallthru
      _
    // Predicated region
    $region10: #{tpu_custom_call.1} parent=1 // pred_check
      _
    $region11: #{tpu_custom_call.1} parent=1 // pred_check_branch
      %39 = sbr.rel (0) target = $region13
    $region12: #{tpu_custom_call.1} parent=1 // pred_region
      %s41 = ssub.s32 4096, 4096
      %42 = vsyncadd [#allocation6], %s41
      %s43 = sshll.u32 [#allocation7], 4
      %s44 = int_to_ptr.vmem [resolvable:$true] %s43
      %49 = dma.hbm_to_vmem [thread:$0]  %s2, 4096, %s44, [#allocation6], 256, 256, 16
    $region13: #{tpu_custom_call.1} parent=1 // pred_fallthru
      _
    // Predicated region
    $region14: #{tpu_custom_call.1} parent=1 // pred_check
      _
    $region15: #{tpu_custom_call.1} parent=1 // pred_check_branch
      %51 = sbr.rel (0) target = $region17
    $region16: #{tpu_custom_call.1} parent=1 // pred_region
      %s53 = ssub.s32 2048, 2048
      %54 = vsyncadd [#allocation9], %s53
      %s55 = sshll.u32 [#allocation8], 4
      %s56 = int_to_ptr.vmem [resolvable:$true] %s55
      %61 = dma.hbm_to_vmem [thread:$0]  %s3, 2048, %s56, [#allocation9], 128, 128, 8
    $region17: #{tpu_custom_call.1} parent=1 // pred_fallthru
      _
    // Predicated region
    $region18: #{tpu_custom_call.1} parent=1 // pred_check
      _
    $region19: #{tpu_custom_call.1} parent=1 // pred_check_branch
      %63 = sbr.rel (0) target = $region21
    $region20: #{tpu_custom_call.1} parent=1 // pred_region
      %s65 = ssub.s32 128, 128
      %66 = vsyncadd [#allocation9], %s65
      %s68 = sshll.u32 [#allocation10], 4
      %s69 = int_to_ptr.vmem [resolvable:$true] %s68
      %71 = dma.hbm_to_vmem [thread:$0]  %s4, 128, %s69, [#allocation9]
    $region21: #{tpu_custom_call.1} parent=1 // pred_fallthru
      _
    // Predicated region
    $region22: #{tpu_custom_call.1} parent=1 // pred_check
      _
    $region23: #{tpu_custom_call.1} parent=1 // pred_check_branch
      %73 = sbr.rel (0) target = $region25
    $region24: #{tpu_custom_call.1} parent=1 // pred_region
      %74 = dma.done [#allocation3], 256
    $region25: #{tpu_custom_call.1} parent=1 // pred_fallthru
      _
    // Predicated region
    $region26: #{tpu_custom_call.1} parent=1 // pred_check
      _
    $region27: #{tpu_custom_call.1} parent=1 // pred_check_branch
      %76 = sbr.rel (0) target = $region29
    $region28: #{tpu_custom_call.1} parent=1 // pred_region
      %77 = dma.done [#allocation6], 512
    $region29: #{tpu_custom_call.1} parent=1 // pred_fallthru
      _
    // Predicated region
    $region30: #{tpu_custom_call.1} parent=1 // pred_check
      _
    $region31: #{tpu_custom_call.1} parent=1 // pred_check_branch
      %79 = sbr.rel (0) target = $region33
    $region32: #{tpu_custom_call.1} parent=1 // pred_region
      %80 = dma.done [#allocation6], 4096
    $region33: #{tpu_custom_call.1} parent=1 // pred_fallthru
      _
    // Predicated region
    $region34: #{tpu_custom_call.1} parent=1 // pred_check
      _
    $region35: #{tpu_custom_call.1} parent=1 // pred_check_branch
      %82 = sbr.rel (0) target = $region37
    $region36: #{tpu_custom_call.1} parent=1 // pred_region
      %83 = dma.done [#allocation9], 2048
    $region37: #{tpu_custom_call.1} parent=1 // pred_fallthru
      _
    // Predicated region
    $region38: #{tpu_custom_call.1} parent=1 // pred_check
      _
    $region39: #{tpu_custom_call.1} parent=1 // pred_check_branch
      %85 = sbr.rel (0) target = $region41
    $region40: #{tpu_custom_call.1} parent=1 // pred_region
      %86 = dma.done [#allocation9], 128
    $region41: #{tpu_custom_call.1} parent=1 // pred_fallthru
      _
    %v87 = vlaneseq
    %v88 = vshrl.u32 %v87, 7
    %v89 = vadd.s32 %v88, 8
    %vm90 = vcmp.lt.s32.totalorder %v88, 8
    %vm91 = vcmp.lt.s32.totalorder %v89, 8
    %v92 = vsel %vm90, -1.0, 1.0
    %v93 = vsel %vm91, -1.0, 1.0
    %v94 = vld [vmem:[#allocation2] sm:$0xff]
    %v95 = vld [vmem:[#allocation2 + $0x8] sm:$0xff]
    %v96 = vmul.f32 %v95, %v92
    %v97 = vmul.f32 %v94, %v93
    %v98 = vld [vmem:[#allocation5] sm:$0xff]
    %v99 = vld [vmem:[#allocation5 + $0x10] sm:$0xff]
    %v100 = vld [vmem:[#allocation5 + $0x8] sm:$0xff]
    %v101 = vld [vmem:[#allocation5 + $0x18] sm:$0xff]
    %vm102 = vcmask 130048
    %v104 = vsel %vm102, %v96, 0
    %v107 = vsel %vm102, %v97, 0
    %109 = vmatprep.subr.mxu0 0.0
    %110 = vmatpush1.msra.mxu0 0.0
    %111 = vmatprep.subr.mxu0 0.0
    %112 = vmatpush1.msra.mxu0 0.0
    %113 = vmatprep.subr.mxu0 0.0
    %114 = vmatpush1.msra.mxu0 0.0
    %115 = vmatprep.subr.mxu0 0.0
    %116 = vmatpush1.msra.mxu0 0.0
    %117 = vmatprep.subr.mxu0 0.0
    %118 = vmatpush1.msra.mxu0 0.0
    %119 = vmatprep.subr.mxu0 0.0
    %120 = vmatpush1.msra.mxu0 0.0
    %121 = vmatprep.subr.mxu0 0.0
    %122 = vmatpush1.msra.mxu0 0.0
    %123 = vmatprep.subr.mxu0 0.0
    %124 = vmatpush1.msra.mxu0 0.0
    %125 = vmatprep.subr.mxu0 0.0
    %126 = vmatpush1.msra.mxu0 0.0
    %127 = vmatprep.subr.mxu0 0.0
    %128 = vmatpush1.msra.mxu0 0.0
    %129 = vmatprep.subr.mxu0 0.0
    %130 = vmatpush1.msra.mxu0 0.0
    %131 = vmatprep.subr.mxu0 0.0
    %132 = vmatpush1.msra.mxu0 0.0
    %133 = vmatprep.subr.mxu0 0.0
    %134 = vmatpush1.msra.mxu0 0.0
    %135 = vmatprep.subr.mxu0 0.0
    %136 = vmatpush1.msra.mxu0 0.0
    %137 = vmatprep.subr.mxu0 0.0
    %138 = vmatpush1.msra.mxu0 %v101
    %139 = vmatprep.subr.mxu0 0.0
    %140 = vmatpush1.msra.mxu0 %v100
    %141 = vmatprep.subr.mxu0 0.0
    %142 = vmatpush2.msra.mxu0 0.0
    %143 = vmatprep.subr.mxu0 0.0
    %144 = vmatpush2.msra.mxu0 0.0
    %145 = vmatprep.subr.mxu0 0.0
    %146 = vmatpush2.msra.mxu0 0.0
    %147 = vmatprep.subr.mxu0 0.0
    %148 = vmatpush2.msra.mxu0 0.0
    %149 = vmatprep.subr.mxu0 0.0
    %150 = vmatpush2.msra.mxu0 0.0
    %151 = vmatprep.subr.mxu0 0.0
    %152 = vmatpush2.msra.mxu0 0.0
    %153 = vmatprep.subr.mxu0 0.0
    %154 = vmatpush2.msra.mxu0 0.0
    %155 = vmatprep.subr.mxu0 0.0
    %156 = vmatpush2.msra.mxu0 0.0
    %157 = vmatprep.subr.mxu0 0.0
    %158 = vmatpush2.msra.mxu0 0.0
    %159 = vmatprep.subr.mxu0 0.0
    %160 = vmatpush2.msra.mxu0 0.0
    %161 = vmatprep.subr.mxu0 0.0
    %162 = vmatpush2.msra.mxu0 0.0
    %163 = vmatprep.subr.mxu0 0.0
    %164 = vmatpush2.msra.mxu0 0.0
    %165 = vmatprep.subr.mxu0 0.0
    %166 = vmatpush2.msra.mxu0 0.0
    %167 = vmatprep.subr.mxu0 0.0
    %168 = vmatpush2.msra.mxu0 0.0
    %169 = vmatprep.subr.mxu0 0.0
    %170 = vmatpush2.msra.mxu0 0.0
    %171 = vmatprep.subr.mxu0 0.0
    %172 = vmatpush2.msra.mxu0 0.0
    %173 = vmatprep.mubr.f32.mxu0 0.0
    %174 = vmatmul.mubr.f32.gmra.mxu0 %v104
    %v175 = vpop.f32.mrf.mxu0
    %v176 = vadd.f32 0.0, %v175
    %v177 = vpop.f32.mrf.mxu0
    %178 = vmatprep.mubr.f32.mxu0 0.0
    %179 = vmatmul.mubr.f32.gmra.mxu0 %v107
    %v180 = vpop.f32.mrf.mxu0
    %v181 = vadd.f32 0.0, %v180
    %v182 = vpop.f32.mrf.mxu0
    %183 = vdwg.mxu0
    %v184 = vld [vmem:[#allocation10] sm:$0x1]
    %v185 = vld [vmem:[#allocation10 + $0x1] sm:$0x1]
    %v186 = vsel %vm90, 1, 0
    %v187 = vsel %vm91, 1, 0
    %vm188 = vcmp.eq.s32.totalorder %v186, 1
    %vm189 = vcmp.eq.s32.totalorder %v187, 1
    %v190 = vlaneseq
    %v191 = vshrl.u32 %v190, 7
    %v192 = vsub.s32 0, %v191
    %v193 = vrot.slane %v184, %v192
    %v194 = vlaneseq
    %v195 = vshrl.u32 %v194, 7
    %v196 = vsub.s32 0, %v195
    %v197 = vrot.slane %v185, %v196
    %v198 = vsel %vm188, %v193, %v197
    %v199 = vsel %vm189, %v193, %v197
    %v201 = vsel %vm102, %v94, 0
    %v204 = vsel %vm102, %v95, 0
    %206 = vmatprep.subr.mxu0 0.0
    %207 = vmatpush1.msra.mxu0 0.0
    %208 = vmatprep.subr.mxu0 0.0
    %209 = vmatpush1.msra.mxu0 0.0
    %210 = vmatprep.subr.mxu0 0.0
    %211 = vmatpush1.msra.mxu0 0.0
    %212 = vmatprep.subr.mxu0 0.0
    %213 = vmatpush1.msra.mxu0 0.0
    %214 = vmatprep.subr.mxu0 0.0
    %215 = vmatpush1.msra.mxu0 0.0
    %216 = vmatprep.subr.mxu0 0.0
    %217 = vmatpush1.msra.mxu0 0.0
    %218 = vmatprep.subr.mxu0 0.0
    %219 = vmatpush1.msra.mxu0 0.0
    %220 = vmatprep.subr.mxu0 0.0
    %221 = vmatpush1.msra.mxu0 0.0
    %222 = vmatprep.subr.mxu0 0.0
    %223 = vmatpush1.msra.mxu0 0.0
    %224 = vmatprep.subr.mxu0 0.0
    %225 = vmatpush1.msra.mxu0 0.0
    %226 = vmatprep.subr.mxu0 0.0
    %227 = vmatpush1.msra.mxu0 0.0
    %228 = vmatprep.subr.mxu0 0.0
    %229 = vmatpush1.msra.mxu0 0.0
    %230 = vmatprep.subr.mxu0 0.0
    %231 = vmatpush1.msra.mxu0 0.0
    %232 = vmatprep.subr.mxu0 0.0
    %233 = vmatpush1.msra.mxu0 0.0
    %234 = vmatprep.subr.mxu0 0.0
    %235 = vmatpush1.msra.mxu0 %v99
    %236 = vmatprep.subr.mxu0 0.0
    %237 = vmatpush1.msra.mxu0 %v98
    %238 = vmatprep.subr.mxu0 0.0
    %239 = vmatpush2.msra.mxu0 0.0
    %240 = vmatprep.subr.mxu0 0.0
    %241 = vmatpush2.msra.mxu0 0.0
    %242 = vmatprep.subr.mxu0 0.0
    %243 = vmatpush2.msra.mxu0 0.0
    %244 = vmatprep.subr.mxu0 0.0
    %245 = vmatpush2.msra.mxu0 0.0
    %246 = vmatprep.subr.mxu0 0.0
    %247 = vmatpush2.msra.mxu0 0.0
    %248 = vmatprep.subr.mxu0 0.0
    %249 = vmatpush2.msra.mxu0 0.0
    %250 = vmatprep.subr.mxu0 0.0
    %251 = vmatpush2.msra.mxu0 0.0
    %252 = vmatprep.subr.mxu0 0.0
    %253 = vmatpush2.msra.mxu0 0.0
    %254 = vmatprep.subr.mxu0 0.0
    %255 = vmatpush2.msra.mxu0 0.0
    %256 = vmatprep.subr.mxu0 0.0
    %257 = vmatpush2.msra.mxu0 0.0
    %258 = vmatprep.subr.mxu0 0.0
    %259 = vmatpush2.msra.mxu0 0.0
    %260 = vmatprep.subr.mxu0 0.0
    %261 = vmatpush2.msra.mxu0 0.0
    %262 = vmatprep.subr.mxu0 0.0
    %263 = vmatpush2.msra.mxu0 0.0
    %264 = vmatprep.subr.mxu0 0.0
    %265 = vmatpush2.msra.mxu0 0.0
    %266 = vmatprep.subr.mxu0 0.0
    %267 = vmatpush2.msra.mxu0 0.0
    %268 = vmatprep.subr.mxu0 0.0
    %269 = vmatpush2.msra.mxu0 0.0
    %270 = vmatprep.mubr.f32.mxu0 0.0
    %271 = vmatmul.mubr.f32.gmra.mxu0 %v201
    %v272 = vpop.f32.mrf.mxu0
    %v273 = vadd.f32 %v176, %v272
    %v274 = vpop.f32.mrf.mxu0
    %275 = vmatprep.mubr.f32.mxu0 0.0
    %276 = vmatmul.mubr.f32.gmra.mxu0 %v204
    %v277 = vpop.f32.mrf.mxu0
    %v278 = vadd.f32 %v181, %v277
    %v279 = vpop.f32.mrf.mxu0
    %280 = vdwg.mxu0
    %v281 = vadd.f32 %v273, %v198
    %v282 = vadd.f32 %v278, %v199
    %v283 = vmax.f32 %v281, 0.0
    %v284 = vmax.f32 %v282, 0.0
    %v285 = vmul.f32 %v284, %v92
    %v286 = vmul.f32 %v283, %v93
    %v287 = vld [vmem:[#allocation7] sm:$0xff]
    %v288 = vld [vmem:[#allocation7 + $0x10] sm:$0xff]
    %v289 = vld [vmem:[#allocation7 + $0x20] sm:$0xff]
    %v290 = vld [vmem:[#allocation7 + $0x30] sm:$0xff]
    %v291 = vld [vmem:[#allocation7 + $0x40] sm:$0xff]
    %v292 = vld [vmem:[#allocation7 + $0x50] sm:$0xff]
    %v293 = vld [vmem:[#allocation7 + $0x60] sm:$0xff]
    %v294 = vld [vmem:[#allocation7 + $0x70] sm:$0xff]
    %v295 = vld [vmem:[#allocation7 + $0x80] sm:$0xff]
    %v296 = vld [vmem:[#allocation7 + $0x90] sm:$0xff]
    %v297 = vld [vmem:[#allocation7 + $0xa0] sm:$0xff]
    %v298 = vld [vmem:[#allocation7 + $0xb0] sm:$0xff]
    %v299 = vld [vmem:[#allocation7 + $0xc0] sm:$0xff]
    %v300 = vld [vmem:[#allocation7 + $0xd0] sm:$0xff]
    %v301 = vld [vmem:[#allocation7 + $0xe0] sm:$0xff]
    %v302 = vld [vmem:[#allocation7 + $0xf0] sm:$0xff]
    %v303 = vld [vmem:[#allocation7 + $0x8] sm:$0xff]
    %v304 = vld [vmem:[#allocation7 + $0x18] sm:$0xff]
    %v305 = vld [vmem:[#allocation7 + $0x28] sm:$0xff]
    %v306 = vld [vmem:[#allocation7 + $0x38] sm:$0xff]
    %v307 = vld [vmem:[#allocation7 + $0x48] sm:$0xff]
    %v308 = vld [vmem:[#allocation7 + $0x58] sm:$0xff]
    %v309 = vld [vmem:[#allocation7 + $0x68] sm:$0xff]
    %v310 = vld [vmem:[#allocation7 + $0x78] sm:$0xff]
    %v311 = vld [vmem:[#allocation7 + $0x88] sm:$0xff]
    %v312 = vld [vmem:[#allocation7 + $0x98] sm:$0xff]
    %v313 = vld [vmem:[#allocation7 + $0xa8] sm:$0xff]
    %v314 = vld [vmem:[#allocation7 + $0xb8] sm:$0xff]
    %v315 = vld [vmem:[#allocation7 + $0xc8] sm:$0xff]
    %v316 = vld [vmem:[#allocation7 + $0xd8] sm:$0xff]
    %v317 = vld [vmem:[#allocation7 + $0xe8] sm:$0xff]
    %v318 = vld [vmem:[#allocation7 + $0xf8] sm:$0xff]
    %319 = vmatprep.subr.mxu0 0.0
    %320 = vmatpush1.msra.mxu0 %v318
    %321 = vmatprep.subr.mxu0 0.0
    %322 = vmatpush1.msra.mxu0 %v317
    %323 = vmatprep.subr.mxu0 0.0
    %324 = vmatpush1.msra.mxu0 %v316
    %325 = vmatprep.subr.mxu0 0.0
    %326 = vmatpush1.msra.mxu0 %v315
    %327 = vmatprep.subr.mxu0 0.0
    %328 = vmatpush1.msra.mxu0 %v314
    %329 = vmatprep.subr.mxu0 0.0
    %330 = vmatpush1.msra.mxu0 %v313
    %331 = vmatprep.subr.mxu0 0.0
    %332 = vmatpush1.msra.mxu0 %v312
    %333 = vmatprep.subr.mxu0 0.0
    %334 = vmatpush1.msra.mxu0 %v311
    %335 = vmatprep.subr.mxu0 0.0
    %336 = vmatpush1.msra.mxu0 %v310
    %337 = vmatprep.subr.mxu0 0.0
    %338 = vmatpush1.msra.mxu0 %v309
    %339 = vmatprep.subr.mxu0 0.0
    %340 = vmatpush1.msra.mxu0 %v308
    %341 = vmatprep.subr.mxu0 0.0
    %342 = vmatpush1.msra.mxu0 %v307
    %343 = vmatprep.subr.mxu0 0.0
    %344 = vmatpush1.msra.mxu0 %v306
    %345 = vmatprep.subr.mxu0 0.0
    %346 = vmatpush1.msra.mxu0 %v305
    %347 = vmatprep.subr.mxu0 0.0
    %348 = vmatpush1.msra.mxu0 %v304
    %349 = vmatprep.subr.mxu0 0.0
    %350 = vmatpush1.msra.mxu0 %v303
    %351 = vmatprep.subr.mxu0 0.0
    %352 = vmatpush2.msra.mxu0 0.0
    %353 = vmatprep.subr.mxu0 0.0
    %354 = vmatpush2.msra.mxu0 0.0
    %355 = vmatprep.subr.mxu0 0.0
    %356 = vmatpush2.msra.mxu0 0.0
    %357 = vmatprep.subr.mxu0 0.0
    %358 = vmatpush2.msra.mxu0 0.0
    %359 = vmatprep.subr.mxu0 0.0
    %360 = vmatpush2.msra.mxu0 0.0
    %361 = vmatprep.subr.mxu0 0.0
    %362 = vmatpush2.msra.mxu0 0.0
    %363 = vmatprep.subr.mxu0 0.0
    %364 = vmatpush2.msra.mxu0 0.0
    %365 = vmatprep.subr.mxu0 0.0
    %366 = vmatpush2.msra.mxu0 0.0
    %367 = vmatprep.subr.mxu0 0.0
    %368 = vmatpush2.msra.mxu0 0.0
    %369 = vmatprep.subr.mxu0 0.0
    %370 = vmatpush2.msra.mxu0 0.0
    %371 = vmatprep.subr.mxu0 0.0
    %372 = vmatpush2.msra.mxu0 0.0
    %373 = vmatprep.subr.mxu0 0.0
    %374 = vmatpush2.msra.mxu0 0.0
    %375 = vmatprep.subr.mxu0 0.0
    %376 = vmatpush2.msra.mxu0 0.0
    %377 = vmatprep.subr.mxu0 0.0
    %378 = vmatpush2.msra.mxu0 0.0
    %379 = vmatprep.subr.mxu0 0.0
    %380 = vmatpush2.msra.mxu0 0.0
    %381 = vmatprep.subr.mxu0 0.0
    %382 = vmatpush2.msra.mxu0 0.0
    %383 = vmatprep.mubr.f32.mxu0 0.0
    %384 = vmatmul.mubr.f32.gmra.mxu0 %v285
    %v385 = vpop.f32.mrf.mxu0
    %v386 = vadd.f32 0.0, %v385
    %v387 = vpop.f32.mrf.mxu0
    %388 = vmatprep.mubr.f32.mxu0 0.0
    %389 = vmatmul.mubr.f32.gmra.mxu0 %v286
    %v390 = vpop.f32.mrf.mxu0
    %v391 = vadd.f32 0.0, %v390
    %v392 = vpop.f32.mrf.mxu0
    %393 = vdwg.mxu0
    %v394 = vld [vmem:[#allocation10 + $0x2] sm:$0x1]
    %v395 = vld [vmem:[#allocation10 + $0x3] sm:$0x1]
    %v396 = vlaneseq
    %v397 = vshrl.u32 %v396, 7
    %v398 = vsub.s32 0, %v397
    %v399 = vrot.slane %v394, %v398
    %v400 = vlaneseq
    %v401 = vshrl.u32 %v400, 7
    %v402 = vsub.s32 0, %v401
    %v403 = vrot.slane %v395, %v402
    %v404 = vsel %vm188, %v399, %v403
    %v405 = vsel %vm189, %v399, %v403
    %406 = vmatprep.subr.mxu0 0.0
    %407 = vmatpush1.msra.mxu0 %v302
    %408 = vmatprep.subr.mxu0 0.0
    %409 = vmatpush1.msra.mxu0 %v301
    %410 = vmatprep.subr.mxu0 0.0
    %411 = vmatpush1.msra.mxu0 %v300
    %412 = vmatprep.subr.mxu0 0.0
    %413 = vmatpush1.msra.mxu0 %v299
    %414 = vmatprep.subr.mxu0 0.0
    %415 = vmatpush1.msra.mxu0 %v298
    %416 = vmatprep.subr.mxu0 0.0
    %417 = vmatpush1.msra.mxu0 %v297
    %418 = vmatprep.subr.mxu0 0.0
    %419 = vmatpush1.msra.mxu0 %v296
    %420 = vmatprep.subr.mxu0 0.0
    %421 = vmatpush1.msra.mxu0 %v295
    %422 = vmatprep.subr.mxu0 0.0
    %423 = vmatpush1.msra.mxu0 %v294
    %424 = vmatprep.subr.mxu0 0.0
    %425 = vmatpush1.msra.mxu0 %v293
    %426 = vmatprep.subr.mxu0 0.0
    %427 = vmatpush1.msra.mxu0 %v292
    %428 = vmatprep.subr.mxu0 0.0
    %429 = vmatpush1.msra.mxu0 %v291
    %430 = vmatprep.subr.mxu0 0.0
    %431 = vmatpush1.msra.mxu0 %v290
    %432 = vmatprep.subr.mxu0 0.0
    %433 = vmatpush1.msra.mxu0 %v289
    %434 = vmatprep.subr.mxu0 0.0
    %435 = vmatpush1.msra.mxu0 %v288
    %436 = vmatprep.subr.mxu0 0.0
    %437 = vmatpush1.msra.mxu0 %v287
    %438 = vmatprep.subr.mxu0 0.0
    %439 = vmatpush2.msra.mxu0 0.0
    %440 = vmatprep.subr.mxu0 0.0
    %441 = vmatpush2.msra.mxu0 0.0
    %442 = vmatprep.subr.mxu0 0.0
    %443 = vmatpush2.msra.mxu0 0.0
    %444 = vmatprep.subr.mxu0 0.0
    %445 = vmatpush2.msra.mxu0 0.0
    %446 = vmatprep.subr.mxu0 0.0
    %447 = vmatpush2.msra.mxu0 0.0
    %448 = vmatprep.subr.mxu0 0.0
    %449 = vmatpush2.msra.mxu0 0.0
    %450 = vmatprep.subr.mxu0 0.0
    %451 = vmatpush2.msra.mxu0 0.0
    %452 = vmatprep.subr.mxu0 0.0
    %453 = vmatpush2.msra.mxu0 0.0
    %454 = vmatprep.subr.mxu0 0.0
    %455 = vmatpush2.msra.mxu0 0.0
    %456 = vmatprep.subr.mxu0 0.0
    %457 = vmatpush2.msra.mxu0 0.0
    %458 = vmatprep.subr.mxu0 0.0
    %459 = vmatpush2.msra.mxu0 0.0
    %460 = vmatprep.subr.mxu0 0.0
    %461 = vmatpush2.msra.mxu0 0.0
    %462 = vmatprep.subr.mxu0 0.0
    %463 = vmatpush2.msra.mxu0 0.0
    %464 = vmatprep.subr.mxu0 0.0
    %465 = vmatpush2.msra.mxu0 0.0
    %466 = vmatprep.subr.mxu0 0.0
    %467 = vmatpush2.msra.mxu0 0.0
    %468 = vmatprep.subr.mxu0 0.0
    %469 = vmatpush2.msra.mxu0 0.0
    %470 = vmatprep.mubr.f32.mxu0 0.0
    %471 = vmatmul.mubr.f32.gmra.mxu0 %v283
    %v472 = vpop.f32.mrf.mxu0
    %v473 = vadd.f32 %v386, %v472
    %v474 = vpop.f32.mrf.mxu0
    %475 = vmatprep.mubr.f32.mxu0 0.0
    %476 = vmatmul.mubr.f32.gmra.mxu0 %v284
    %v477 = vpop.f32.mrf.mxu0
    %v478 = vadd.f32 %v391, %v477
    %v479 = vpop.f32.mrf.mxu0
    %480 = vdwg.mxu0
    %v481 = vadd.f32 %v473, %v404
    %v482 = vadd.f32 %v478, %v405
    %v483 = vmax.f32 %v481, 0.0
    %v484 = vmax.f32 %v482, 0.0
    %v485 = vld [vmem:[#allocation8] sm:$0xff]
    %v486 = vld [vmem:[#allocation8 + $0x8] sm:$0xff]
    %v487 = vld [vmem:[#allocation8 + $0x10] sm:$0xff]
    %v488 = vld [vmem:[#allocation8 + $0x18] sm:$0xff]
    %v489 = vld [vmem:[#allocation8 + $0x20] sm:$0xff]
    %v490 = vld [vmem:[#allocation8 + $0x28] sm:$0xff]
    %v491 = vld [vmem:[#allocation8 + $0x30] sm:$0xff]
    %v492 = vld [vmem:[#allocation8 + $0x38] sm:$0xff]
    %v493 = vld [vmem:[#allocation8 + $0x40] sm:$0xff]
    %v494 = vld [vmem:[#allocation8 + $0x48] sm:$0xff]
    %v495 = vld [vmem:[#allocation8 + $0x50] sm:$0xff]
    %v496 = vld [vmem:[#allocation8 + $0x58] sm:$0xff]
    %v497 = vld [vmem:[#allocation8 + $0x60] sm:$0xff]
    %v498 = vld [vmem:[#allocation8 + $0x68] sm:$0xff]
    %v499 = vld [vmem:[#allocation8 + $0x70] sm:$0xff]
    %v500 = vld [vmem:[#allocation8 + $0x78] sm:$0xff]
    %501 = vmatprep.subr.mxu0 0.0
    %502 = vmatpush1.msra.mxu0 %v500
    %503 = vmatprep.subr.mxu0 0.0
    %504 = vmatpush1.msra.mxu0 %v499
    %505 = vmatprep.subr.mxu0 0.0
    %506 = vmatpush1.msra.mxu0 %v498
    %507 = vmatprep.subr.mxu0 0.0
    %508 = vmatpush1.msra.mxu0 %v497
    %509 = vmatprep.subr.mxu0 0.0
    %510 = vmatpush1.msra.mxu0 %v496
    %511 = vmatprep.subr.mxu0 0.0
    %512 = vmatpush1.msra.mxu0 %v495
    %513 = vmatprep.subr.mxu0 0.0
    %514 = vmatpush1.msra.mxu0 %v494
    %515 = vmatprep.subr.mxu0 0.0
    %516 = vmatpush1.msra.mxu0 %v493
    %517 = vmatprep.subr.mxu0 0.0
    %518 = vmatpush1.msra.mxu0 %v492
    %519 = vmatprep.subr.mxu0 0.0
    %520 = vmatpush1.msra.mxu0 %v491
    %521 = vmatprep.subr.mxu0 0.0
    %522 = vmatpush1.msra.mxu0 %v490
    %523 = vmatprep.subr.mxu0 0.0
    %524 = vmatpush1.msra.mxu0 %v489
    %525 = vmatprep.subr.mxu0 0.0
    %526 = vmatpush1.msra.mxu0 %v488
    %527 = vmatprep.subr.mxu0 0.0
    %528 = vmatpush1.msra.mxu0 %v487
    %529 = vmatprep.subr.mxu0 0.0
    %530 = vmatpush1.msra.mxu0 %v486
    %531 = vmatprep.subr.mxu0 0.0
    %532 = vmatpush1.msra.mxu0 %v485
    %533 = vmatprep.subr.mxu0 0.0
    %534 = vmatpush2.msra.mxu0 0.0
    %535 = vmatprep.subr.mxu0 0.0
    %536 = vmatpush2.msra.mxu0 0.0
    %537 = vmatprep.subr.mxu0 0.0
    %538 = vmatpush2.msra.mxu0 0.0
    %539 = vmatprep.subr.mxu0 0.0
    %540 = vmatpush2.msra.mxu0 0.0
    %541 = vmatprep.subr.mxu0 0.0
    %542 = vmatpush2.msra.mxu0 0.0
    %543 = vmatprep.subr.mxu0 0.0
    %544 = vmatpush2.msra.mxu0 0.0
    %545 = vmatprep.subr.mxu0 0.0
    %546 = vmatpush2.msra.mxu0 0.0
    %547 = vmatprep.subr.mxu0 0.0
    %548 = vmatpush2.msra.mxu0 0.0
    %549 = vmatprep.subr.mxu0 0.0
    %550 = vmatpush2.msra.mxu0 0.0
    %551 = vmatprep.subr.mxu0 0.0
    %552 = vmatpush2.msra.mxu0 0.0
    %553 = vmatprep.subr.mxu0 0.0
    %554 = vmatpush2.msra.mxu0 0.0
    %555 = vmatprep.subr.mxu0 0.0
    %556 = vmatpush2.msra.mxu0 0.0
    %557 = vmatprep.subr.mxu0 0.0
    %558 = vmatpush2.msra.mxu0 0.0
    %559 = vmatprep.subr.mxu0 0.0
    %560 = vmatpush2.msra.mxu0 0.0
    %561 = vmatprep.subr.mxu0 0.0
    %562 = vmatpush2.msra.mxu0 0.0
    %563 = vmatprep.subr.mxu0 0.0
    %564 = vmatpush2.msra.mxu0 0.0
    %565 = vmatprep.mubr.f32.mxu0 0.0
    %566 = vmatmul.mubr.f32.gmra.mxu0 %v483
    %v567 = vpop.f32.mrf.mxu0
    %v568 = vadd.f32 0.0, %v567
    %v569 = vpop.f32.mrf.mxu0
    %570 = vmatprep.mubr.f32.mxu0 0.0
    %571 = vmatmul.mubr.f32.gmra.mxu0 %v484
    %v572 = vpop.f32.mrf.mxu0
    %v573 = vadd.f32 0.0, %v572
    %v574 = vpop.f32.mrf.mxu0
    %575 = vdwg.mxu0
    %577 = vrot.lane.b32.xlu0 %v573, 64
    %v578 = vpop.permute.xlu0 %577
    %v580 = vsub.f32 %v568, %v578
    %582 = vrot.lane.b32.xlu0 %v568, 64
    %v583 = vpop.permute.xlu0 %582
    %v585 = vadd.f32 %v573, %v583
    %587 = vrot.lane.b32.xlu0 %v585, 64
    %v588 = vpop.permute.xlu0 %587
    %vm590 = vcmask 523264
    %v591 = vsel %vm590, %v580, %v588
    %v592 = vld [vmem:[#allocation10 + $0x4] sm:$0x1]
    %v593 = vlaneseq
    %v594 = vshrl.u32 %v593, 7
    %v595 = vsub.s32 0, %v594
    %v596 = vrot.slane %v592, %v595
    %v597 = vadd.f32 %v591, %v596
    %v598 = vlaneseq
    %v599 = vand.u32 %v598, 127
    %v600 = vand.u32 %v599, 63
    %vm601 = vcmp.ge.s32.totalorder %v600, 4
    %vm602 = vcmp.lt.s32.totalorder %v600, 8
    %vm603 = vmand %vm601, %vm602
    %v604 = vxor.u32 %v597, 2147483648
    %v605 = vmul.f32 %v604, 1.442695
    %v606 = vpow.pop %v605
    %v607 = vadd.f32 %v606, 1.0
    %v608 = vrcp.pop %v607
    %v609 = vmul.f32 1.0, %v608
    %v610 = vsel %vm603, %v609, %v597
    %611 = vst [vmem:[#allocation11] sm:$0xff] %v610
    // Predicated region
    $region42: #{tpu_custom_call.1} parent=1 // pred_check
      _
    $region43: #{tpu_custom_call.1} parent=1 // pred_check_branch
      %613 = sbr.rel (0) target = $region45
    $region44: #{tpu_custom_call.1} parent=1 // pred_region
      %s615 = ssub.s32 128, 128
      %616 = vsyncadd [#allocation4], %s615
      %s618 = sshll.u32 [#allocation11], 4
      %s619 = int_to_ptr.vmem [resolvable:$true] %s618
      %621 = dma.vmem_to_hbm [thread:$0]  %s619, 128, %s5, [#allocation4]
    $region45: #{tpu_custom_call.1} parent=1 // pred_fallthru
      _
    // Predicated region
    $region46: #{tpu_custom_call.1} parent=1 // pred_check
      _
    $region47: #{tpu_custom_call.1} parent=1 // pred_check_branch
      %623 = sbr.rel (0) target = $region49
    $region48: #{tpu_custom_call.1} parent=1 // pred_region
      %624 = dma.done [#allocation4], 128
    $region49: #{tpu_custom_call.1} parent=1 // pred_fallthru
      _
    %625 = vsyncpa [#allocation3], 1
    %626 = vsyncpa [#allocation6], 1
    %627 = vsyncpa [#allocation9], 1
    %628 = vsyncpa [#allocation4], 1

</llo_original>
